<compile_context>
chip_gen: v7x
topology: tpu7x:2x2x1
jax: 0.10.0
libtpu: 0.0.40
codegen_flags: <defaults>
</compile_context>

<pallas_src>
import functools

import jax
import jax.numpy as jnp
from jax.experimental import pallas as pl
from jax.experimental.pallas import tpu as pltpu


def _round_up(x, m):
    return (x + m - 1) // m * m


def _tversky_kernel(x_ref, t_ref, loss_ref, *, alpha, beta, gamma, scale,
                    ignore_index, eps, smooth, num_classes):
    x = x_ref[...].astype(jnp.float32)            # (tile_n, C)  ragged C is fine
    t = t_ref[...]                                # (tile_n, 1) int32

    # Row-wise softmax pieces.  The class axis is not padded in HBM; Mosaic
    # masks the out-of-bounds lanes inside the reductions.
    m = jnp.max(x, axis=-1, keepdims=True)
    e = jnp.exp(x - m)
    # Exact reciprocal (one divide per row) -- approx=True would cost ~2^-12
    # relative error in the loss.
    inv = 1.0 / jnp.sum(e, axis=-1, keepdims=True)

    # intersection == focal(p_target): gather e[target] via a masked reduce
    # (no (tile_n, C) one-hot materialization, no extra full-tile product).
    classes = jax.lax.broadcasted_iota(jnp.int32, x.shape, 1)
    e_t = jnp.sum(jnp.where(classes == t, e, 0.0), axis=-1, keepdims=True)
    p_t = e_t * inv                                               # (tile_n, 1)

    if gamma == 0:
        # focal(p) == scale * p, and sum_c scale*p_c == scale exactly, so the
        # per-element softmax never needs to be materialized.
        inter = scale * p_t
        sum_p = scale
    else:
        p = e * inv
        pf = scale * (1.0 - p) ** gamma * p        # integer_pow for int gamma
        sum_p = jnp.sum(pf, axis=-1, keepdims=True)
        inter = scale * (1.0 - p_t) ** gamma * p_t                # (tile_n, 1)

    # one_hot row-sum: 1 iff the target is a real class (F.one_hot semantics).
    oh_sum = jnp.logical_and(t >= 0, t < num_classes).astype(jnp.float32)
    fps = sum_p - inter                      # == sum(focal(p) * (1 - one_hot))
    fns = oh_sum - inter                     # == sum((1 - focal(p)) * one_hot)

    denominator = inter + alpha * fps + beta * fns
    loss = 1.0 - (inter + smooth) / (denominator + eps + smooth)  # (tile_n, 1)

    valid = (t != ignore_index).astype(jnp.float32)
    loss_ref[...] = loss * valid


def tversky_loss(logits, target, *, alpha, beta, gamma=0, scale=1.0,
                 reduction='mean', ignore_index=-100, eps=1e-6, smooth=0.0,
                 max_tile_rows=1024):
    """Pallas TverskyLoss.  logits: (N, C) float, target: (N,) int."""
    if logits.ndim != 2:
        raise ValueError(f'Invalid input shape, we expect NxC. Got: {logits.shape}')
    if logits.shape[0] != target.shape[0]:
        raise ValueError('number of elements in input and target must match')

    N, C = logits.shape

    # ---- row tiling sized against the REAL VMEM working set ------------------
    itemsize = jnp.dtype(logits.dtype).itemsize
    lanes_c = _round_up(C, 128)              # VMEM lane footprint of one row
    # double-buffered input block + ~4 live (tile_n, C) f32 temporaries
    bytes_per_row = lanes_c * (2 * itemsize + 4 * 4)
    budget = 12 * 1024 * 1024                # headroom under v5e's 16 MiB default
    tile_n = min(int(max_tile_rows), budget // bytes_per_row)
    tile_n = max(8, tile_n // 8 * 8)
    tile_n = min(tile_n, _round_up(N, 8))
    # Keep >= ~8 grid steps when N allows, so v7x megacore gets a real split.
    tile_n = min(tile_n, _round_up((N + 7) // 8, 8))
    vmem_limit = int(min(max(32 << 20, tile_n * bytes_per_row + (2 << 20)),
                         64 << 20))

    grid = (pl.cdiv(N, tile_n),)             # boundary block: garbage in, writes dropped
    target2d = target.astype(jnp.int32).reshape(N, 1)

    g = float(gamma)
    gamma_c = int(g) if g.is_integer() else g    # keep float gamma semantics

    kernel = functools.partial(
        _tversky_kernel,
        alpha=float(alpha), beta=float(beta), gamma=gamma_c,
        scale=float(scale), ignore_index=int(ignore_index),
        eps=float(eps), smooth=float(smooth), num_classes=int(C))

    loss_rows = pl.pallas_call(
        kernel,
        out_shape=jax.ShapeDtypeStruct((N, 1), jnp.float32),
        grid=grid,
        in_specs=[pl.BlockSpec((tile_n, C), lambda i: (i, 0)),
                  pl.BlockSpec((tile_n, 1), lambda i: (i, 0))],
        out_specs=pl.BlockSpec((tile_n, 1), lambda i: (i, 0)),
        compiler_params=pltpu.CompilerParams(
            dimension_semantics=("parallel",),   # megacore-splittable on v7x
            vmem_limit_bytes=vmem_limit),
    )(logits, target2d)

    if reduction == 'mean':
        valid_cnt = jnp.sum((target != ignore_index).astype(jnp.float32))
        # 0/0 = NaN when every row is ignored, matching torch.mean of empty.
        return jnp.sum(loss_rows) / valid_cnt
    elif reduction == 'sum':
        return jnp.sum(loss_rows)
    else:
        # TODO(synk): reduction='none' needs a dynamically-shaped masked output.
        raise NotImplementedError(f'Invalid reduction mode: {reduction}')


def _ref_tversky_loss(logits, target, *, alpha, beta, gamma, scale,
                      ignore_index, eps, smooth, reduction='mean'):
    """Pure-JAX reference mirroring the PyTorch forward."""
    C = logits.shape[1]
    p = jax.nn.softmax(logits.astype(jnp.float32), axis=1)
    p = scale * (1.0 - p) ** gamma * p
    mask = (target != ignore_index).astype(jnp.float32)
    oh = jax.nn.one_hot(target, C, dtype=jnp.float32)   # out-of-range -> zero row
    inter = jnp.sum(p * oh, -1)
    fps = jnp.sum(p * (1.0 - oh), -1)
    fns = jnp.sum((1.0 - p) * oh, -1)
    denom = inter + alpha * fps + beta * fns
    loss = 1.0 - (inter + smooth) / (denom + eps + smooth)
    if reduction == 'mean':
        return jnp.sum(loss * mask) / jnp.sum(mask)
    return jnp.sum(loss * mask)


if __name__ == "__main__":
    key = jax.random.PRNGKey(0)
    k1, k2, k3, k4, k5, k6 = jax.random.split(key, 6)

    # Case 1: tiny C (=5), focal gamma=2, ignore_index rows, N not a multiple
    # of the tile (boundary block garbage rows must be dropped).
    N1, C1 = 13, 5
    logits1 = jax.random.normal(k1, (N1, C1), dtype=jnp.float32)
    target1 = jax.random.randint(k2, (N1,), 0, C1, dtype=jnp.int32)
    target1 = target1.at[3].set(-100).at[9].set(-100)
    kw1 = dict(alpha=0.5, beta=0.7, gamma=2, scale=1.0,
               ignore_index=-100, eps=1e-6, smooth=0.0)
    out1 = jax.block_until_ready(
        tversky_loss(logits1, target1, reduction='mean', **kw1))
    ref1 = _ref_tversky_loss(logits1, target1, reduction='mean', **kw1)
    assert jnp.allclose(out1, ref1, atol=1e-5, rtol=1e-5), (out1, ref1)

    # Case 2: ragged C=250 (NO padding -> Mosaic masks the ragged lanes),
    # gamma=0 fast path, smooth>0.
    N2, C2 = 40, 250
    logits2 = jax.random.normal(k3, (N2, C2), dtype=jnp.float32)
    target2 = jax.random.randint(k4, (N2,), 0, C2, dtype=jnp.int32)
    kw2 = dict(alpha=0.3, beta=0.7, gamma=0, scale=1.0,
               ignore_index=-100, eps=1e-6, smooth=1.0)
    out2 = jax.block_until_ready(
        tversky_loss(logits2, target2, reduction='mean', **kw2))
    ref2 = _ref_tversky_loss(logits2, target2, reduction='mean', **kw2)
    assert jnp.allclose(out2, ref2, atol=1e-5, rtol=1e-5), (out2, ref2)

    # Case 3: multi-tile grid with a ragged boundary block (N=150, tile=64 ->
    # 3 steps, last block half-garbage), ragged C=130, gamma=1, reduction='sum'.
    N3, C3 = 150, 130
    logits3 = jax.random.normal(k5, (N3, C3), dtype=jnp.float32)
    target3 = jax.random.randint(k6, (N3,), 0, C3, dtype=jnp.int32)
    target3 = target3.at[0].set(-100).at[149].set(-100)
    kw3 = dict(alpha=0.4, beta=0.6, gamma=1, scale=0.75,
               ignore_index=-100, eps=1e-6, smooth=0.5)
    out3 = jax.block_until_ready(
        tversky_loss(logits3, target3, reduction='sum', max_tile_rows=64, **kw3))
    ref3 = _ref_tversky_loss(logits3, target3, reduction='sum', **kw3)
    assert jnp.allclose(out3, ref3, atol=1e-4, rtol=1e-5), (out3, ref3)

    print("KERNEL_OK")
</pallas_src>

<mosaic_0001>
module attributes {stable_mosaic.version = 11 : i64} {
  func.func @_tversky_kernel(%arg0: i32, %arg1: memref<8x5xf32, #tpu.memory_space<vmem>>, %arg2: memref<8x1xi32, #tpu.memory_space<vmem>>, %arg3: memref<8x1xf32, #tpu.memory_space<vmem>>) attributes {dimension_semantics = [#tpu.dimension_semantics<parallel>], iteration_bounds = array<i64: 2>, scalar_prefetch = 0 : i64, scratch_operands = 0 : i64, tpu.core_type = #tpu.core_type<tc>, window_params = [{transform_indices = @transform_0, window_bounds = array<i64: 8, 5>}, {transform_indices = @transform_1, window_bounds = array<i64: 8, 1>}, {transform_indices = @transform_2, window_bounds = array<i64: 8, 1>}]} {
    %c0 = arith.constant 0 : index
    %c0_0 = arith.constant 0 : index
    %0 = vector.load %arg1[%c0, %c0_0] : memref<8x5xf32, #tpu.memory_space<vmem>>, vector<8x5xf32>
    %c0_1 = arith.constant 0 : index
    %c0_2 = arith.constant 0 : index
    %1 = vector.load %arg2[%c0_1, %c0_2] : memref<8x1xi32, #tpu.memory_space<vmem>>, vector<8x1xi32>
    %cst = arith.constant dense<0xFF800000> : vector<8xf32>
    %2 = vector.multi_reduction <maximumf>, %0, %cst [1] : vector<8x5xf32> to vector<8xf32>
    %3 = vector.shape_cast %2 : vector<8xf32> to vector<8x1xf32>
    %4 = vector.broadcast %3 : vector<8x1xf32> to vector<8x5xf32>
    %5 = arith.subf %0, %4 : vector<8x5xf32>
    %6 = math.exp %5 : vector<8x5xf32>
    %cst_3 = arith.constant dense<0.000000e+00> : vector<8xf32>
    %7 = vector.multi_reduction <add>, %6, %cst_3 [1] : vector<8x5xf32> to vector<8xf32>
    %8 = vector.shape_cast %7 : vector<8xf32> to vector<8x1xf32>
    %cst_4 = arith.constant 1.000000e+00 : f32
    %9 = vector.broadcast %cst_4 : f32 to vector<8x1xf32>
    %10 = arith.divf %9, %8 : vector<8x1xf32>
    %11 = tpu.iota {dimensions = array<i32: 1>} : vector<8x5xi32>
    %12 = vector.broadcast %1 : vector<8x1xi32> to vector<8x5xi32>
    %13 = arith.cmpi eq, %11, %12 : vector<8x5xi32>
    %cst_5 = arith.constant 0.000000e+00 : f32
    %14 = vector.broadcast %cst_5 : f32 to vector<8x5xf32>
    %15 = arith.select %13, %6, %14 : vector<8x5xi1>, vector<8x5xf32>
    %cst_6 = arith.constant dense<0.000000e+00> : vector<8xf32>
    %16 = vector.multi_reduction <add>, %15, %cst_6 [1] : vector<8x5xf32> to vector<8xf32>
    %17 = vector.shape_cast %16 : vector<8xf32> to vector<8x1xf32>
    %18 = arith.mulf %17, %10 : vector<8x1xf32>
    %19 = vector.broadcast %10 : vector<8x1xf32> to vector<8x5xf32>
    %20 = arith.mulf %6, %19 : vector<8x5xf32>
    %cst_7 = arith.constant 1.000000e+00 : f32
    %21 = vector.broadcast %cst_7 : f32 to vector<8x5xf32>
    %22 = arith.subf %21, %20 : vector<8x5xf32>
    %23 = arith.mulf %22, %22 : vector<8x5xf32>
    %cst_8 = arith.constant 1.000000e+00 : f32
    %24 = vector.broadcast %cst_8 : f32 to vector<8x5xf32>
    %25 = arith.mulf %24, %23 : vector<8x5xf32>
    %26 = arith.mulf %25, %20 : vector<8x5xf32>
    %cst_9 = arith.constant dense<0.000000e+00> : vector<8xf32>
    %27 = vector.multi_reduction <add>, %26, %cst_9 [1] : vector<8x5xf32> to vector<8xf32>
    %28 = vector.shape_cast %27 : vector<8xf32> to vector<8x1xf32>
    %cst_10 = arith.constant 1.000000e+00 : f32
    %29 = vector.broadcast %cst_10 : f32 to vector<8x1xf32>
    %30 = arith.subf %29, %18 : vector<8x1xf32>
    %31 = arith.mulf %30, %30 : vector<8x1xf32>
    %cst_11 = arith.constant 1.000000e+00 : f32
    %32 = vector.broadcast %cst_11 : f32 to vector<8x1xf32>
    %33 = arith.mulf %32, %31 : vector<8x1xf32>
    %34 = arith.mulf %33, %18 : vector<8x1xf32>
    %c0_i32 = arith.constant 0 : i32
    %35 = vector.broadcast %c0_i32 : i32 to vector<8x1xi32>
    %36 = arith.cmpi sge, %1, %35 : vector<8x1xi32>
    %c5_i32 = arith.constant 5 : i32
    %37 = vector.broadcast %c5_i32 : i32 to vector<8x1xi32>
    %38 = arith.cmpi slt, %1, %37 : vector<8x1xi32>
    %39 = arith.andi %36, %38 : vector<8x1xi1>
    %40 = arith.extui %39 : vector<8x1xi1> to vector<8x1xi32>
    %41 = arith.sitofp %40 : vector<8x1xi32> to vector<8x1xf32>
    %42 = arith.subf %28, %34 : vector<8x1xf32>
    %43 = arith.subf %41, %34 : vector<8x1xf32>
    %cst_12 = arith.constant 5.000000e-01 : f32
    %44 = vector.broadcast %cst_12 : f32 to vector<8x1xf32>
    %45 = arith.mulf %44, %42 : vector<8x1xf32>
    %46 = arith.addf %34, %45 : vector<8x1xf32>
    %cst_13 = arith.constant 0.699999988 : f32
    %47 = vector.broadcast %cst_13 : f32 to vector<8x1xf32>
    %48 = arith.mulf %47, %43 : vector<8x1xf32>
    %49 = arith.addf %46, %48 : vector<8x1xf32>
    %cst_14 = arith.constant 0.000000e+00 : f32
    %50 = vector.broadcast %cst_14 : f32 to vector<8x1xf32>
    %51 = arith.addf %34, %50 : vector<8x1xf32>
    %cst_15 = arith.constant 9.99999997E-7 : f32
    %52 = vector.broadcast %cst_15 : f32 to vector<8x1xf32>
    %53 = arith.addf %49, %52 : vector<8x1xf32>
    %cst_16 = arith.constant 0.000000e+00 : f32
    %54 = vector.broadcast %cst_16 : f32 to vector<8x1xf32>
    %55 = arith.addf %53, %54 : vector<8x1xf32>
    %56 = arith.divf %51, %55 : vector<8x1xf32>
    %cst_17 = arith.constant 1.000000e+00 : f32
    %57 = vector.broadcast %cst_17 : f32 to vector<8x1xf32>
    %58 = arith.subf %57, %56 : vector<8x1xf32>
    %c-100_i32 = arith.constant -100 : i32
    %59 = vector.broadcast %c-100_i32 : i32 to vector<8x1xi32>
    %60 = arith.cmpi ne, %1, %59 : vector<8x1xi32>
    %61 = arith.extui %60 : vector<8x1xi1> to vector<8x1xi32>
    %62 = arith.sitofp %61 : vector<8x1xi32> to vector<8x1xf32>
    %63 = arith.mulf %58, %62 : vector<8x1xf32>
    %c0_18 = arith.constant 0 : index
    %c0_19 = arith.constant 0 : index
    %64 = vector.load %arg3[%c0_18, %c0_19] : memref<8x1xf32, #tpu.memory_space<vmem>>, vector<8x1xf32>
    tpu.vector_store %arg3[%c0_18, %c0_19], %63 {strides = array<i32>} : memref<8x1xf32, #tpu.memory_space<vmem>>, vector<8x1xf32>,
    return
  }
  func.func @transform_0(%arg0: i32) -> (i32, i32) {
    %c0_i32 = arith.constant 0 : i32
    %c0_i32_0 = arith.constant 0 : i32
    return %arg0, %c0_i32 : i32, i32
  }
  func.func @transform_1(%arg0: i32) -> (i32, i32) {
    %c0_i32 = arith.constant 0 : i32
    %c0_i32_0 = arith.constant 0 : i32
    return %arg0, %c0_i32 : i32, i32
  }
  func.func @transform_2(%arg0: i32) -> (i32, i32) {
    %c0_i32 = arith.constant 0 : i32
    %c0_i32_0 = arith.constant 0 : i32
    return %arg0, %c0_i32 : i32, i32
  }
}

</mosaic_0001>

<llo_original>
// kernel: tpu_custom_call.1
$region0: #{tpu_custom_call.1}
  #allocation0 [shape = 'u32[]', space=smem, size = 0x4, offset = 0x4, fixed_abs, tag = 'smem constant byte address 0x4 - core index']
  #allocation1 [shape = 'u32[144,128]{1,0:T(1,128)}', space=vmem, size = 0x12000, scoped, tag = 'internal scratch']
  %s0 = inlined_call_operand.vmem [shape: f32[13,5], index: 0, kind: input, shape index: {}]
  %s1 = inlined_call_operand.vmem [shape: s32[13,1], index: 1, kind: input, shape index: {}]
  %s2 = inlined_call_operand.vmem [shape: f32[13,1], index: 2, kind: output, shape index: {}]
  %s3 = sld [smem:[#allocation0]]
  $region41: #{tpu_custom_call.1} parent=0
    _
  %s5 = ssub.s32 1, %s3
  %s6 = scalar_select 0, %s5, %s3
  loop: start=0, step=1, limit=4
  $region2: #{tpu_custom_call.1} parent=0 // loop_pre_header
    _
  $region3: #{tpu_custom_call.1} parent=0 // loop_header
    %s8 = sphi 0, %s12
    %p9 = scmp.ge.s32.totalorder %s8, 4
    %s18 = sphi 0, %s20
    %s21 = sphi 0, %s18
    %s22 = sphi 0, %s21
    %s38 = sphi 0, %s22
    %s44 = sphi 0, %s46
    %s47 = sphi 0, %s44
    %s48 = sphi 0, %s47
    %s64 = sphi 0, %s48
    %s70 = sphi 0, %s72
    %s73 = sphi 0, %s70
    %s74 = sphi 0, %s73
    %s90 = sphi 0, %s74
  $region4: #{tpu_custom_call.1} parent=0 // loop_header_branch
    %11 = sbr.rel (%p9) target = $region8
  $region5: #{tpu_custom_call.1} parent=0 // loop_body
    %s13 = ssub.s32 %s8, 1
    %s14 = ssub.s32 %s8, 2
    %s15 = sadd.s32 %s8, 1
    %s16 = ssub.s32 %s8, %s15
    %p17 = scmp.eq.s32.totalorder %s16, 0
    %s19 = sadd.s32 %s18, 1
    %s20 = scalar_select %p17, %s18, %s19
    %p23 = pneg %p17
    %p24 = scmp.eq.s32.totalorder %s8, 1
    %p25 = por %p23, %p24
    %p26 = scmp.ne.s32.totalorder %s18, %s21
    %p27 = scmp.eq.s32.totalorder %s8, 0
    %p28 = por %p26, %p27
    %p29 = scmp.ne.s32.totalorder %s18, %s21
    %p30 = scmp.eq.s32.totalorder %s13, 1
    %p31 = por %p29, %p30
    %p32 = scmp.ne.s32.totalorder %s21, %s22
    %p33 = scmp.eq.s32.totalorder %s13, 0
    %p34 = por %p32, %p33
    %p35 = scmp.ne.s32.totalorder %s21, %s22
    %p36 = scmp.eq.s32.totalorder %s14, 1
    %p37 = por %p35, %p36
    %p39 = scmp.ne.s32.totalorder %s22, %s38
    %p40 = scmp.eq.s32.totalorder %s14, 0
    %p41 = por %p39, %p40
    %s42 = ssub.s32 %s8, %s15
    %p43 = scmp.eq.s32.totalorder %s42, 0
    %s45 = sadd.s32 %s44, 1
    %s46 = scalar_select %p43, %s44, %s45
    %p49 = pneg %p43
    %p50 = scmp.eq.s32.totalorder %s8, 1
    %p51 = por %p49, %p50
    %p52 = scmp.ne.s32.totalorder %s44, %s47
    %p53 = scmp.eq.s32.totalorder %s8, 0
    %p54 = por %p52, %p53
    %p55 = scmp.ne.s32.totalorder %s44, %s47
    %p56 = scmp.eq.s32.totalorder %s13, 1
    %p57 = por %p55, %p56
    %p58 = scmp.ne.s32.totalorder %s47, %s48
    %p59 = scmp.eq.s32.totalorder %s13, 0
    %p60 = por %p58, %p59
    %p61 = scmp.ne.s32.totalorder %s47, %s48
    %p62 = scmp.eq.s32.totalorder %s14, 1
    %p63 = por %p61, %p62
    %p65 = scmp.ne.s32.totalorder %s48, %s64
    %p66 = scmp.eq.s32.totalorder %s14, 0
    %p67 = por %p65, %p66
    %s68 = ssub.s32 %s8, %s15
    %p69 = scmp.eq.s32.totalorder %s68, 0
    %s71 = sadd.s32 %s70, 1
    %s72 = scalar_select %p69, %s70, %s71
    %p75 = pneg %p69
    %p76 = scmp.eq.s32.totalorder %s8, 1
    %p77 = por %p75, %p76
    %p78 = scmp.ne.s32.totalorder %s70, %s73
    %p79 = scmp.eq.s32.totalorder %s8, 0
    %p80 = por %p78, %p79
    %p81 = scmp.ne.s32.totalorder %s70, %s73
    %p82 = scmp.eq.s32.totalorder %s13, 1
    %p83 = por %p81, %p82
    %p84 = scmp.ne.s32.totalorder %s73, %s74
    %p85 = scmp.eq.s32.totalorder %s13, 0
    %p86 = por %p84, %p85
    %p87 = scmp.ne.s32.totalorder %s73, %s74
    %p88 = scmp.eq.s32.totalorder %s14, 1
    %p89 = por %p87, %p88
    %p91 = scmp.ne.s32.totalorder %s74, %s90
    %p92 = scmp.eq.s32.totalorder %s14, 0
    %p93 = por %p91, %p92
    %p94 = scmp.le.s32.totalorder 1, %s8
    %p95 = scmp.lt.s32.totalorder %s8, 3
    %p96 = pnand %p94, %p95
    %p97 = pneg %p96
    // Predicated region
    $region9: #{tpu_custom_call.1} parent=5 // pred_check
      _
    $region10: #{tpu_custom_call.1} parent=5 // pred_check_branch
      %99 = sbr.rel (%p96) target = $region12
    $region11: #{tpu_custom_call.1} parent=5 // pred_region
      %s100 = ssub.s32 %s8, 1
    $region12: #{tpu_custom_call.1} parent=5 // pred_fallthru
      _
    %p101 = scmp.lt.s32.totalorder %s8, 2
    // Predicated region
    $region13: #{tpu_custom_call.1} parent=5 // pred_check
      %p102 = pneg %p101
    $region14: #{tpu_custom_call.1} parent=5 // pred_check_branch
      %104 = sbr.rel (%p102) target = $region16
    $region15: #{tpu_custom_call.1} parent=5 // pred_region
      // Predicated region
      $region17: #{tpu_custom_call.1} parent=15 // pred_check
        %p105 = pneg %p28
      $region18: #{tpu_custom_call.1} parent=15 // pred_check_branch
        %107 = sbr.rel (%p105) target = $region20
      $region19: #{tpu_custom_call.1} parent=15 // pred_region
        %p108 = scmp.lt.s32.totalorder %s8, 1
        %s109 = scalar_select %p108, %s8, 1
        %s110 = smul.addr %s109, 8
        %s111 = scalar_lea.vmem %s0, %s110
      $region20: #{tpu_custom_call.1} parent=15 // pred_fallthru
        _
      // Predicated region
      $region21: #{tpu_custom_call.1} parent=15 // pred_check
        %p112 = pneg %p54
      $region22: #{tpu_custom_call.1} parent=15 // pred_check_branch
        %114 = sbr.rel (%p112) target = $region24
      $region23: #{tpu_custom_call.1} parent=15 // pred_region
        %p115 = scmp.lt.s32.totalorder %s8, 1
        %s116 = scalar_select %p115, %s8, 1
        %s117 = smul.addr %s116, 8
        %s118 = scalar_lea.vmem %s1, %s117
      $region24: #{tpu_custom_call.1} parent=15 // pred_fallthru
        _
    $region16: #{tpu_custom_call.1} parent=5 // pred_fallthru
      _
    %p119 = scmp.le.s32.totalorder 1, %s8
    %p120 = scmp.lt.s32.totalorder %s8, 3
    %p121 = pnand %p119, %p120
    %p122 = pneg %p121
    // Predicated region
    $region25: #{tpu_custom_call.1} parent=5 // pred_check
      _
    $region26: #{tpu_custom_call.1} parent=5 // pred_check_branch
      %124 = sbr.rel (%p121) target = $region28
    $region27: #{tpu_custom_call.1} parent=5 // pred_region
      %s125 = ssub.s32 %s8, 1
      %p126 = scmp.lt.s32.totalorder %s13, 1
      %s127 = scalar_select %p126, %s13, 1
      %s128 = smul.addr %s127, 8
      %s129 = scalar_lea.vmem %s0, %s128
      %p130 = pneg %p34
      %p131 = pneg %p31
      %p132 = scmp.lt.s32.totalorder %s13, 1
      %s133 = scalar_select %p132, %s13, 1
      %s134 = smul.addr %s133, 8
      %s135 = scalar_lea.vmem %s1, %s134
      %p136 = pneg %p60
      %p137 = pneg %p57
      %p138 = pneg %p86
      %p139 = pneg %p83
      %p140 = scmp.lt.s32.totalorder %s13, 1
      %s141 = scalar_select %p140, %s13, 1
      %s142 = smul.addr %s141, 8
      %s143 = scalar_lea.vmem %s2, %s142
      %p144 = scmp.lt.s32.totalorder %s13, 1
      %s145 = scalar_select %p144, %s13, 1
      %s146 = smul.addr %s145, 8
      %s147 = scalar_lea.vmem %s0, %s146
      %p148 = scmp.lt.s32.totalorder %s13, 1
      %s149 = scalar_select %p148, %s13, 1
      %s150 = smul.addr %s149, 8
      %s151 = scalar_lea.vmem %s1, %s150
      %p152 = scmp.lt.s32.totalorder %s13, 1
      %s153 = scalar_select %p152, %s13, 1
      %s154 = smul.addr %s153, 8
      %s155 = scalar_lea.vmem %s2, %s154
      %v156 = vld [vmem:[%s147] sm:$0xff]
      %v157 = vld [vmem:[%s151] sm:$0xff]
      %vm158 = vcmask 39936
      %v159 = vsel %vm158, %v156, -inf
      %160 = vmax.xlane.f32.xlu0 %v159
      %v161 = vpop.xlane.xlu0 %160
      %v162 = vsub.f32 %v156, %v161
      %v163 = vmul.f32 %v162, 1.442695
      %v164 = vpow.pop %v163
      %v165 = vsel %vm158, %v164, 0.0
      %166 = vadd.xlane.f32.xlu0 %v165
      %v167 = vpop.xlane.xlu0 %166
      %v168 = vrcp.pop %v167
      %v169 = vmul.f32 1.0, %v168
      %v170 = vlaneseq
      %v171 = vand.u32 %v170, 127
      %172 = vset.pattern.permute.xlu0 0
      %173 = vperm.xlu0 %172, %v157
      %v174 = vpop.permute.xlu0 %173
      %vm175 = vcmp.eq.s32.totalorder %v171, %v174
      %v176 = vsel %vm175, %v164, 0.0
      %v177 = vsel %vm158, %v176, 0.0
      %178 = vadd.xlane.f32.xlu0 %v177
      %v179 = vpop.xlane.xlu0 %178
      %v180 = vmul.f32 %v179, %v169
      %v181 = vmul.f32 %v164, %v169
      %v182 = vsub.f32 1.0, %v181
      %v183 = vmul.f32 %v182, %v182
      %v184 = vmul.f32 %v183, %v181
      %v185 = vsel %vm158, %v184, 0.0
      %186 = vadd.xlane.f32.xlu0 %v185
      %v187 = vpop.xlane.xlu0 %186
      %v188 = vsub.f32 1.0, %v180
      %v189 = vmul.f32 %v188, %v188
      %v190 = vmul.f32 %v189, %v180
      %vm191 = vcmp.ge.s32.totalorder %v157, 0
      %vm192 = vcmp.lt.s32.totalorder %v157, 5
      %vm193 = vmand %vm191, %vm192
      %v194 = vsel %vm193, 1, 0
      %v195 = vcvt.s32.f32 %v194
      %v196 = vsub.f32 %v187, %v190
      %v197 = vsub.f32 %v195, %v190
      %v198 = vmul.f32 %v196, 0.5
      %v199 = vadd.f32 %v190, %v198
      %v200 = vmul.f32 %v197, 0.7
      %v201 = vadd.f32 %v199, %v200
      %v202 = vadd.f32 %v190, 0.0
      %v203 = vadd.f32 %v201, 1e-06
      %v204 = vadd.f32 %v203, 0.0
      %v205 = vrcp.pop %v204
      %v206 = vmul.f32 %v202, %v205
      %v207 = vsub.f32 1.0, %v206
      %vm208 = vcmp.ne.s32.totalorder %v157, 4294967196
      %v209 = vsel %vm208, 1, 0
      %v210 = vcvt.s32.f32 %v209
      %v211 = vmul.f32 %v207, %v210
      %vm212 = vcmask 7168
      %213 = vst.msk [vmem:[%s155] sm:$0xff] %vm212, %v211
      %p214 = scmp.lt.s32.totalorder %s13, 1
      %s215 = scalar_select %p214, %s13, 1
      %s216 = smul.addr %s215, 8
      %s217 = scalar_lea.vmem %s2, %s216
      // Predicated region
      $region29: #{tpu_custom_call.1} parent=27 // pred_check
        %p218 = pneg %p83
      $region30: #{tpu_custom_call.1} parent=27 // pred_check_branch
        %220 = sbr.rel (%p218) target = $region32
      $region31: #{tpu_custom_call.1} parent=27 // pred_region
        _
      $region32: #{tpu_custom_call.1} parent=27 // pred_fallthru
        _
    $region28: #{tpu_custom_call.1} parent=5 // pred_fallthru
      _
    %p221 = scmp.le.s32.totalorder 2, %s8
    // Predicated region
    $region33: #{tpu_custom_call.1} parent=5 // pred_check
      %p222 = pneg %p221
    $region34: #{tpu_custom_call.1} parent=5 // pred_check_branch
      %224 = sbr.rel (%p222) target = $region36
    $region35: #{tpu_custom_call.1} parent=5 // pred_region
      %s225 = ssub.s32 %s8, 2
      // Predicated region
      $region37: #{tpu_custom_call.1} parent=35 // pred_check
        %p226 = pneg %p89
      $region38: #{tpu_custom_call.1} parent=35 // pred_check_branch
        %228 = sbr.rel (%p226) target = $region40
      $region39: #{tpu_custom_call.1} parent=35 // pred_region
        %p229 = scmp.lt.s32.totalorder %s14, 1
        %s230 = scalar_select %p229, %s14, 1
        %s231 = smul.addr %s230, 8
        %s232 = scalar_lea.vmem %s2, %s231
      $region40: #{tpu_custom_call.1} parent=35 // pred_fallthru
        _
    $region36: #{tpu_custom_call.1} parent=5 // pred_fallthru
      _
  $region6: #{tpu_custom_call.1} parent=0 // loop_footer
    %s12 = sadd.s32 1, %s8
  $region7: #{tpu_custom_call.1} parent=0 // loop_footer_branch
    %7 = sbr.rel target = $region3
  $region8: #{tpu_custom_call.1} parent=0 // loop_exit
    _

</llo_original>
